<compile_context>
chip_gen: v7x
topology: tpu7x:2x2x1
jax: 0.10.0
libtpu: 0.0.40
codegen_flags: <defaults>
</compile_context>

<pallas_src>
import functools
import math

import jax
import jax.numpy as jnp
from jax.experimental import pallas as pl
from jax.experimental.pallas import tpu as pltpu


# ---------------------------------------------------------------------------
# Tiling helpers
# ---------------------------------------------------------------------------
def _sublane_align(dtype):
    """Packed sublane count for a dtype: 8 (f32), 16 (bf16), 32 (int8/fp8)."""
    itemsize = jnp.dtype(dtype).itemsize
    return max(8, 32 // max(itemsize, 1))


def _pick_tile(dim, preferred, align):
    """Largest tile <= `preferred` that divides `dim` and is a multiple of
    `align`.  Falls back to the full dimension (always a legal block shape)."""
    # TODO(synk): for very large dims not divisible by `align`, pad-and-mask
    # instead of falling back to a single huge block.
    if dim % align != 0:
        return dim
    t = min(preferred, dim)
    t -= t % align
    while t > align and dim % t != 0:
        t -= align
    if t <= 0 or dim % t != 0:
        return dim
    return t


def _apply_act(y, activation):
    if activation == "relu":
        return jnp.maximum(y, 0.0)
    if activation == "sigmoid":
        return jax.nn.sigmoid(y)
    return y


# ---------------------------------------------------------------------------
# Fused MLP kernel: the whole Linear(+act) chain in one pallas_call.
# Grid: (M // tm,).  Weights/biases resident in VMEM (constant index_map),
# intermediates live in vregs/VMEM only — no HBM round-trip.
# ---------------------------------------------------------------------------
def _fused_mlp_kernel(*refs, activations, n_linear):
    x_ref = refs[0]
    o_ref = refs[-1]
    h = x_ref[...]
    for idx in range(n_linear):
        w_ref = refs[1 + 2 * idx]
        b_ref = refs[2 + 2 * idx]
        # Native-dtype operands -> MXU; f32 accumulation.
        y = jnp.dot(h, w_ref[...], preferred_element_type=jnp.float32)
        y = y + b_ref[...].astype(jnp.float32)
        y = _apply_act(y, activations[idx])
        if idx + 1 < n_linear:
            # Keep the next matmul's LHS in the parameter dtype (same rounding
            # as the unfused layer-by-layer execution).
            h = y.astype(w_ref.dtype)
        else:
            h = y
    o_ref[...] = h.astype(o_ref.dtype)


def fused_mlp_forward(x, weights, biases, activations, tm_pref=256):
    """y = act_n(... act_1(x @ W1 + b1) ... @ Wn + bn), single pallas_call."""
    M = x.shape[0]
    n_linear = len(weights)
    tm = _pick_tile(M, tm_pref, _sublane_align(x.dtype))
    grid = (M // tm,)

    in_specs = [pl.BlockSpec((tm, x.shape[1]), lambda i: (i, 0))]
    operands = [x]
    for w, b in zip(weights, biases):
        K, N = w.shape
        in_specs.append(pl.BlockSpec((K, N), lambda i: (0, 0)))   # resident
        in_specs.append(pl.BlockSpec((1, N), lambda i: (0, 0)))   # resident
        operands.append(w)
        operands.append(b.reshape(1, N))

    out_features = weights[-1].shape[1]
    kernel = functools.partial(
        _fused_mlp_kernel, activations=tuple(activations), n_linear=n_linear)

    return pl.pallas_call(
        kernel,
        out_shape=jax.ShapeDtypeStruct((M, out_features), x.dtype),
        grid_spec=pltpu.PrefetchScalarGridSpec(
            num_scalar_prefetch=0,
            grid=grid,
            in_specs=in_specs,
            out_specs=pl.BlockSpec((tm, out_features), lambda i: (i, 0)),
        ),
        compiler_params=pltpu.CompilerParams(
            dimension_semantics=("parallel",)),
    )(*operands)


def _fusion_fits_vmem(x, weights, biases, tm_pref=256,
                      budget_bytes=24 * 1024 * 1024):
    """Rough VMEM budget: params (x2 for buffering) + x/out tiles (x2) +
    per-tile intermediates must fit comfortably."""
    M = x.shape[0]
    tm = _pick_tile(M, tm_pref, _sublane_align(x.dtype))
    param_bytes = sum(w.size * w.dtype.itemsize for w in weights)
    param_bytes += sum(b.size * b.dtype.itemsize for b in biases)
    io_bytes = tm * x.shape[1] * x.dtype.itemsize
    io_bytes += tm * weights[-1].shape[1] * x.dtype.itemsize
    inter_bytes = sum(tm * w.shape[1] * 4 for w in weights)
    total = 2 * param_bytes + 2 * io_bytes + inter_bytes
    return total <= budget_bytes


# ---------------------------------------------------------------------------
# Generic tiled Linear (+ fused activation):  y = act(x @ w + b)
# Used when the fully-fused path does not apply (e.g. huge weights).
# ---------------------------------------------------------------------------
def _linear_kernel_acc(x_ref, w_ref, b_ref, o_ref, acc_ref, *, activation):
    k = pl.program_id(2)

    @pl.when(k == 0)
    def _init():
        acc_ref[...] = jnp.zeros_like(acc_ref)

    acc_ref[...] += jnp.dot(x_ref[...], w_ref[...],
                            preferred_element_type=jnp.float32)

    @pl.when(k == pl.num_programs(2) - 1)
    def _finalize():
        y = acc_ref[...] + b_ref[...].astype(jnp.float32)
        o_ref[...] = _apply_act(y, activation).astype(o_ref.dtype)


def _linear_kernel_single_k(x_ref, w_ref, b_ref, o_ref, *, activation):
    y = jnp.dot(x_ref[...], w_ref[...], preferred_element_type=jnp.float32)
    y = y + b_ref[...].astype(jnp.float32)
    o_ref[...] = _apply_act(y, activation).astype(o_ref.dtype)


def linear_forward(x, w, b, activation=None,
                   tm_pref=256, tn_pref=256, tk_pref=512):
    M, K = x.shape
    Kw, N = w.shape
    assert K == Kw, (K, Kw)
    b2 = b.reshape(1, N)  # lane-dense bias slab

    tm = _pick_tile(M, tm_pref, _sublane_align(x.dtype))
    tn = _pick_tile(N, tn_pref, 128)
    tk = _pick_tile(K, tk_pref, 128)
    grid = (M // tm, N // tn, K // tk)
    single_k = grid[2] == 1

    if single_k:
        kernel = functools.partial(_linear_kernel_single_k,
                                   activation=activation)
        scratch_shapes = []
    else:
        kernel = functools.partial(_linear_kernel_acc, activation=activation)
        scratch_shapes = [pltpu.VMEM((tm, tn), jnp.float32)]

    return pl.pallas_call(
        kernel,
        out_shape=jax.ShapeDtypeStruct((M, N), x.dtype),
        grid_spec=pltpu.PrefetchScalarGridSpec(
            num_scalar_prefetch=0,
            grid=grid,
            in_specs=[
                pl.BlockSpec((tm, tk), lambda i, j, k: (i, k)),
                pl.BlockSpec((tk, tn), lambda i, j, k: (k, j)),
                pl.BlockSpec((1, tn), lambda i, j, k: (0, j)),
            ],
            out_specs=pl.BlockSpec((tm, tn), lambda i, j, k: (i, j)),
            scratch_shapes=scratch_shapes,
        ),
        compiler_params=pltpu.CompilerParams(
            dimension_semantics=("parallel", "parallel", "arbitrary")),
    )(x, w, b2)


# ---------------------------------------------------------------------------
# Standalone elementwise activation kernel (fallback only)
# ---------------------------------------------------------------------------
def _eltwise_kernel(x_ref, o_ref, *, activation):
    x = x_ref[...]
    if activation == "sigmoid":
        x = x.astype(jnp.float32)
    o_ref[...] = _apply_act(x, activation).astype(o_ref.dtype)


def activation_forward(x, activation, tr_pref=512, tc_pref=1024):
    orig_shape = x.shape
    C = orig_shape[-1]
    R = math.prod(orig_shape[:-1]) if len(orig_shape) > 1 else 1
    x2 = x.reshape(R, C)

    tr = _pick_tile(R, tr_pref, _sublane_align(x.dtype))
    tc = _pick_tile(C, tc_pref, 128)
    grid = (R // tr, C // tc)

    kernel = functools.partial(_eltwise_kernel, activation=activation)
    y2 = pl.pallas_call(
        kernel,
        out_shape=jax.ShapeDtypeStruct((R, C), x.dtype),
        grid_spec=pltpu.PrefetchScalarGridSpec(
            num_scalar_prefetch=0,
            grid=grid,
            in_specs=[pl.BlockSpec((tr, tc), lambda i, j: (i, j))],
            out_specs=pl.BlockSpec((tr, tc), lambda i, j: (i, j)),
        ),
        compiler_params=pltpu.CompilerParams(
            dimension_semantics=("parallel", "parallel")),
    )(x2)
    return y2.reshape(orig_shape)


# ---------------------------------------------------------------------------
# Module framework (mirrors the PyTorch spec)
# ---------------------------------------------------------------------------
class Module:
    def forward(self, *input):
        raise NotImplementedError

    def backward(self, *output):
        raise NotImplementedError

    def parameters(self):
        raise NotImplementedError


class Linear(Module):
    def __init__(self, in_features, out_features, key, dtype=jnp.float32):
        kw, kb = jax.random.split(key)
        bound = 1.0 / math.sqrt(in_features)
        # Weight stored as (in, out) so the kernel computes x @ w + b directly.
        self.weight = jax.random.uniform(
            kw, (in_features, out_features), dtype, minval=-bound, maxval=bound)
        self.bias = jax.random.uniform(
            kb, (out_features,), dtype, minval=-bound, maxval=bound)

    def forward(self, input, fused_activation=None):
        return linear_forward(input, self.weight, self.bias, fused_activation)

    def parameters(self):
        return [self.weight, self.bias]

    # TODO(synk): backward pass (gradient kernels) not implemented in Pallas.


class ReLU(Module):
    name = "relu"

    def forward(self, input):
        return activation_forward(input, self.name)

    def parameters(self):
        return []


class Sigmoid(Module):
    name = "sigmoid"

    def forward(self, input):
        return activation_forward(input, self.name)

    def parameters(self):
        return []


class Sequential(Module):
    def __init__(self, *layers):
        self.layers = layers

    # -- fusion planning ----------------------------------------------------
    def _plan_fused_chain(self):
        """If the layer stack is (Linear [ReLU|Sigmoid]?)+ return the
        (weights, biases, activations) chain, else None."""
        weights, biases, acts = [], [], []
        layers = list(self.layers)
        i = 0
        while i < len(layers):
            layer = layers[i]
            if not isinstance(layer, Linear):
                return None
            weights.append(layer.weight)
            biases.append(layer.bias)
            nxt = layers[i + 1] if i + 1 < len(layers) else None
            if isinstance(nxt, (ReLU, Sigmoid)):
                acts.append(nxt.name)
                i += 2
            else:
                acts.append(None)
                i += 1
        return weights, biases, acts

    def forward(self, input):
        # Fully-fused path: the whole MLP in one pallas_call, weights resident
        # in VMEM, hidden activations never hit HBM.
        plan = self._plan_fused_chain()
        if (plan is not None and input.ndim == 2
                and _fusion_fits_vmem(input, plan[0], plan[1])):
            weights, biases, acts = plan
            return fused_mlp_forward(input, weights, biases, acts)

        # Fallback: per-layer kernels, activation fused into the preceding
        # Linear's epilogue where possible.
        layers = list(self.layers)
        i = 0
        while i < len(layers):
            layer = layers[i]
            nxt = layers[i + 1] if i + 1 < len(layers) else None
            if isinstance(layer, Linear) and isinstance(nxt, (ReLU, Sigmoid)):
                input = layer.forward(input, fused_activation=nxt.name)
                i += 2
            else:
                input = layer.forward(input)
                i += 1
        return input

    def parameters(self):
        parameters = []
        for layer in self.layers:
            parameters.extend(layer.parameters())
        return parameters


# ---------------------------------------------------------------------------
# Demo / self-test
# ---------------------------------------------------------------------------
if __name__ == "__main__":
    key = jax.random.PRNGKey(0)
    kx, k1, k2 = jax.random.split(key, 3)

    batch, in_features, hidden, out_features = 8, 128, 256, 128
    x = jax.random.normal(kx, (batch, in_features), jnp.float32)

    model = Sequential(
        Linear(in_features, hidden, k1),
        ReLU(),
        Linear(hidden, out_features, k2),
        Sigmoid(),
    )

    y = jax.block_until_ready(model.forward(x))

    # Pure-JAX reference for the same layer stack.
    l1, l3 = model.layers[0], model.layers[2]
    h = jnp.maximum(jnp.dot(x, l1.weight) + l1.bias, 0.0)
    ref = jax.nn.sigmoid(jnp.dot(h, l3.weight) + l3.bias)

    assert y.shape == (batch, out_features), y.shape
    assert jnp.allclose(y, ref, atol=5e-3), float(jnp.max(jnp.abs(y - ref)))

    # Also exercise the fallback (per-layer) path for coverage.
    y_fallback = jax.block_until_ready(
        Sequential(ReLU()).forward(x))  # standalone activation kernel
    assert jnp.allclose(y_fallback, jnp.maximum(x, 0.0)), "relu fallback"

    print("KERNEL_OK")
</pallas_src>

<mosaic_0001>
module attributes {stable_mosaic.version = 11 : i64} {
  func.func @_fused_mlp_kernel(%arg0: i32, %arg1: memref<8x128xf32, #tpu.memory_space<vmem>>, %arg2: memref<128x256xf32, #tpu.memory_space<vmem>>, %arg3: memref<1x256xf32, #tpu.memory_space<vmem>>, %arg4: memref<256x128xf32, #tpu.memory_space<vmem>>, %arg5: memref<1x128xf32, #tpu.memory_space<vmem>>, %arg6: memref<8x128xf32, #tpu.memory_space<vmem>>) attributes {dimension_semantics = [#tpu.dimension_semantics<parallel>], iteration_bounds = array<i64: 1>, scalar_prefetch = 0 : i64, scratch_operands = 0 : i64, tpu.core_type = #tpu.core_type<tc>, window_params = [{transform_indices = @transform_0, window_bounds = array<i64: 8, 128>}, {pipeline_mode = #tpu.pipeline_mode<synchronous>, transform_indices = @transform_1, window_bounds = array<i64: 128, 256>}, {pipeline_mode = #tpu.pipeline_mode<synchronous>, transform_indices = @transform_2, window_bounds = array<i64: 1, 256>}, {pipeline_mode = #tpu.pipeline_mode<synchronous>, transform_indices = @transform_3, window_bounds = array<i64: 256, 128>}, {pipeline_mode = #tpu.pipeline_mode<synchronous>, transform_indices = @transform_4, window_bounds = array<i64: 1, 128>}, {transform_indices = @transform_5, window_bounds = array<i64: 8, 128>}]} {
    %c0 = arith.constant 0 : index
    %c0_0 = arith.constant 0 : index
    %0 = vector.load %arg1[%c0, %c0_0] : memref<8x128xf32, #tpu.memory_space<vmem>>, vector<8x128xf32>
    %c0_1 = arith.constant 0 : index
    %c0_2 = arith.constant 0 : index
    %1 = vector.load %arg2[%c0_1, %c0_2] : memref<128x256xf32, #tpu.memory_space<vmem>>, vector<128x256xf32>
    %cst = arith.constant dense<0.000000e+00> : vector<8x256xf32>
    %2 = tpu.matmul %0, %1, %cst {dimension_numbers = #tpu.dot_dimension_numbers<[1], [0], [0], [1], [0, 0, 1, 1], [], []>} : vector<8x128xf32>, vector<128x256xf32>, vector<8x256xf32> -> vector<8x256xf32>
    %c0_3 = arith.constant 0 : index
    %c0_4 = arith.constant 0 : index
    %3 = vector.load %arg3[%c0_3, %c0_4] : memref<1x256xf32, #tpu.memory_space<vmem>>, vector<1x256xf32>
    %4 = vector.broadcast %3 : vector<1x256xf32> to vector<8x256xf32>
    %5 = arith.addf %2, %4 : vector<8x256xf32>
    %cst_5 = arith.constant 0.000000e+00 : f32
    %6 = vector.broadcast %cst_5 : f32 to vector<8x256xf32>
    %7 = arith.maximumf %5, %6 : vector<8x256xf32>
    %c0_6 = arith.constant 0 : index
    %c0_7 = arith.constant 0 : index
    %8 = vector.load %arg4[%c0_6, %c0_7] : memref<256x128xf32, #tpu.memory_space<vmem>>, vector<256x128xf32>
    %cst_8 = arith.constant dense<0.000000e+00> : vector<8x128xf32>
    %9 = tpu.matmul %7, %8, %cst_8 {dimension_numbers = #tpu.dot_dimension_numbers<[1], [0], [0], [1], [0, 0, 1, 1], [], []>} : vector<8x256xf32>, vector<256x128xf32>, vector<8x128xf32> -> vector<8x128xf32>
    %c0_9 = arith.constant 0 : index
    %c0_10 = arith.constant 0 : index
    %10 = vector.load %arg5[%c0_9, %c0_10] : memref<1x128xf32, #tpu.memory_space<vmem>>, vector<1x128xf32>
    %11 = vector.broadcast %10 : vector<1x128xf32> to vector<8x128xf32>
    %12 = arith.addf %9, %11 : vector<8x128xf32>
    %13 = arith.negf %12 : vector<8x128xf32>
    %14 = math.exp %13 : vector<8x128xf32>
    %cst_11 = arith.constant 1.000000e+00 : f32
    %15 = vector.broadcast %cst_11 : f32 to vector<8x128xf32>
    %16 = arith.addf %15, %14 : vector<8x128xf32>
    %17 = arith.divf %15, %16 : vector<8x128xf32>
    %c0_12 = arith.constant 0 : index
    %c0_13 = arith.constant 0 : index
    %18 = vector.load %arg6[%c0_12, %c0_13] : memref<8x128xf32, #tpu.memory_space<vmem>>, vector<8x128xf32>
    tpu.vector_store %arg6[%c0_12, %c0_13], %17 {strides = array<i32>} : memref<8x128xf32, #tpu.memory_space<vmem>>, vector<8x128xf32>,
    return
  }
  func.func @transform_0(%arg0: i32) -> (i32, i32) {
    %c0_i32 = arith.constant 0 : i32
    %c0_i32_0 = arith.constant 0 : i32
    return %arg0, %c0_i32 : i32, i32
  }
  func.func @transform_1(%arg0: i32) -> (i32, i32) {
    %c0_i32 = arith.constant 0 : i32
    %c0_i32_0 = arith.constant 0 : i32
    %c0_i32_1 = arith.constant 0 : i32
    return %c0_i32, %c0_i32_0 : i32, i32
  }
  func.func @transform_2(%arg0: i32) -> (i32, i32) {
    %c0_i32 = arith.constant 0 : i32
    %c0_i32_0 = arith.constant 0 : i32
    %c0_i32_1 = arith.constant 0 : i32
    return %c0_i32, %c0_i32_0 : i32, i32
  }
  func.func @transform_3(%arg0: i32) -> (i32, i32) {
    %c0_i32 = arith.constant 0 : i32
    %c0_i32_0 = arith.constant 0 : i32
    %c0_i32_1 = arith.constant 0 : i32
    return %c0_i32, %c0_i32_0 : i32, i32
  }
  func.func @transform_4(%arg0: i32) -> (i32, i32) {
    %c0_i32 = arith.constant 0 : i32
    %c0_i32_0 = arith.constant 0 : i32
    %c0_i32_1 = arith.constant 0 : i32
    return %c0_i32, %c0_i32_0 : i32, i32
  }
  func.func @transform_5(%arg0: i32) -> (i32, i32) {
    %c0_i32 = arith.constant 0 : i32
    %c0_i32_0 = arith.constant 0 : i32
    return %arg0, %c0_i32 : i32, i32
  }
}

</mosaic_0001>

<llo_original>
// kernel: tpu_custom_call.1
$region0: #{tpu_custom_call.1}
  #allocation0 [shape = 'u32[]', space=smem, size = 0x4, offset = 0x4, fixed_abs, tag = 'smem constant byte address 0x4 - core index']
  #allocation1 [shape = 'u32[144,128]{1,0:T(1,128)}', space=vmem, size = 0x12000, scoped, tag = 'internal scratch']
  %s0 = inlined_call_operand.hbm [shape: f32[8,128], index: 0, kind: input, shape index: {}]
  %s1 = inlined_call_operand.hbm [shape: f32[128,256], index: 1, kind: input, shape index: {}]
  %s2 = inlined_call_operand.vmem [shape: f32[1,256], index: 2, kind: input, shape index: {}]
  %s3 = inlined_call_operand.hbm [shape: f32[256,128], index: 3, kind: input, shape index: {}]
  %s4 = inlined_call_operand.vmem [shape: f32[1,128], index: 4, kind: input, shape index: {}]
  %s5 = inlined_call_operand.hbm [shape: f32[8,128], index: 5, kind: output, shape index: {}]
  %s6 = sld [smem:[#allocation0]]
  $region42: #{tpu_custom_call.1} parent=0
    _
  %s8 = ssub.s32 1, %s6
  %s9 = scalar_select 0, %s8, %s6
  $region1: #{tpu_custom_call.1} parent=0
    #allocation2 [shape = 'u8[4096]{0}', space=vmem, size = 0x1000, scoped, tag = 'input window, operand 0, single buffered']
    #allocation3 [shape = 's32[1]{0}', space=sflag, size = 0x4, scoped, tag = 'scoped memory for tpu_custom_call.1']
    #allocation4 [shape = 's32[1]{0}', space=sflag, size = 0x4, scoped, tag = 'scoped memory for tpu_custom_call.1']
    #allocation5 [shape = 'u8[131072]{0}', space=vmem, size = 0x20000, scoped, tag = 'input window, operand 1, single buffered']
    #allocation6 [shape = 's32[1]{0}', space=sflag, size = 0x4, scoped, tag = 'scoped memory for tpu_custom_call.1']
    #allocation7 [shape = 'u8[131072]{0}', space=vmem, size = 0x20000, scoped, tag = 'input window, operand 3, single buffered']
    #allocation8 [shape = 'u8[4096]{0}', space=vmem, size = 0x1000, scoped, tag = 'output window, operand 0, single buffered']
    %10 = vsyncpa [#allocation3], 0
    %11 = vsyncpa [#allocation6], 0
    %12 = vsyncpa [#allocation4], 0
    // Predicated region
    $region2: #{tpu_custom_call.1} parent=1 // pred_check
      _
    $region3: #{tpu_custom_call.1} parent=1 // pred_check_branch
      %14 = sbr.rel (0) target = $region5
    $region4: #{tpu_custom_call.1} parent=1 // pred_region
      %s16 = ssub.s32 128, 128
      %17 = vsyncadd [#allocation3], %s16
      %s19 = sshll.u32 [#allocation2], 4
      %s20 = int_to_ptr.vmem [resolvable:$true] %s19
      %22 = dma.hbm_to_vmem [thread:$0]  %s0, 128, %s20, [#allocation3]
    $region5: #{tpu_custom_call.1} parent=1 // pred_fallthru
      _
    // Predicated region
    $region6: #{tpu_custom_call.1} parent=1 // pred_check
      _
    $region7: #{tpu_custom_call.1} parent=1 // pred_check_branch
      %24 = sbr.rel (0) target = $region9
    $region8: #{tpu_custom_call.1} parent=1 // pred_region
      %s26 = ssub.s32 4096, 4096
      %27 = vsyncadd [#allocation6], %s26
      %s28 = sshll.u32 [#allocation5], 4
      %s29 = int_to_ptr.vmem [resolvable:$true] %s28
      %34 = dma.hbm_to_vmem [thread:$0]  %s1, 4096, %s29, [#allocation6], 256, 256, 16
    $region9: #{tpu_custom_call.1} parent=1 // pred_fallthru
      _
    // Predicated region
    $region10: #{tpu_custom_call.1} parent=1 // pred_check
      _
    $region11: #{tpu_custom_call.1} parent=1 // pred_check_branch
      %36 = sbr.rel (0) target = $region13
    $region12: #{tpu_custom_call.1} parent=1 // pred_region
      _
    $region13: #{tpu_custom_call.1} parent=1 // pred_fallthru
      _
    // Predicated region
    $region14: #{tpu_custom_call.1} parent=1 // pred_check
      _
    $region15: #{tpu_custom_call.1} parent=1 // pred_check_branch
      %38 = sbr.rel (0) target = $region17
    $region16: #{tpu_custom_call.1} parent=1 // pred_region
      %s40 = ssub.s32 4096, 4096
      %41 = vsyncadd [#allocation6], %s40
      %s42 = sshll.u32 [#allocation7], 4
      %s43 = int_to_ptr.vmem [resolvable:$true] %s42
      %48 = dma.hbm_to_vmem [thread:$0]  %s3, 4096, %s43, [#allocation6], 128, 128, 8
    $region17: #{tpu_custom_call.1} parent=1 // pred_fallthru
      _
    // Predicated region
    $region18: #{tpu_custom_call.1} parent=1 // pred_check
      _
    $region19: #{tpu_custom_call.1} parent=1 // pred_check_branch
      %50 = sbr.rel (0) target = $region21
    $region20: #{tpu_custom_call.1} parent=1 // pred_region
      _
    $region21: #{tpu_custom_call.1} parent=1 // pred_fallthru
      _
    // Predicated region
    $region22: #{tpu_custom_call.1} parent=1 // pred_check
      _
    $region23: #{tpu_custom_call.1} parent=1 // pred_check_branch
      %52 = sbr.rel (0) target = $region25
    $region24: #{tpu_custom_call.1} parent=1 // pred_region
      %53 = dma.done [#allocation3], 128
    $region25: #{tpu_custom_call.1} parent=1 // pred_fallthru
      _
    // Predicated region
    $region26: #{tpu_custom_call.1} parent=1 // pred_check
      _
    $region27: #{tpu_custom_call.1} parent=1 // pred_check_branch
      %55 = sbr.rel (0) target = $region29
    $region28: #{tpu_custom_call.1} parent=1 // pred_region
      %56 = dma.done [#allocation6], 4096
    $region29: #{tpu_custom_call.1} parent=1 // pred_fallthru
      _
    // Predicated region
    $region30: #{tpu_custom_call.1} parent=1 // pred_check
      _
    $region31: #{tpu_custom_call.1} parent=1 // pred_check_branch
      %58 = sbr.rel (0) target = $region33
    $region32: #{tpu_custom_call.1} parent=1 // pred_region
      %59 = dma.done [#allocation6], 4096
    $region33: #{tpu_custom_call.1} parent=1 // pred_fallthru
      _
    %v60 = vld [vmem:[#allocation2] sm:$0xff]
    %v61 = vld [vmem:[#allocation5] sm:$0xff]
    %v62 = vld [vmem:[#allocation5 + $0x8] sm:$0xff]
    %v63 = vld [vmem:[#allocation5 + $0x10] sm:$0xff]
    %v64 = vld [vmem:[#allocation5 + $0x18] sm:$0xff]
    %v65 = vld [vmem:[#allocation5 + $0x20] sm:$0xff]
    %v66 = vld [vmem:[#allocation5 + $0x28] sm:$0xff]
    %v67 = vld [vmem:[#allocation5 + $0x30] sm:$0xff]
    %v68 = vld [vmem:[#allocation5 + $0x38] sm:$0xff]
    %v69 = vld [vmem:[#allocation5 + $0x40] sm:$0xff]
    %v70 = vld [vmem:[#allocation5 + $0x48] sm:$0xff]
    %v71 = vld [vmem:[#allocation5 + $0x50] sm:$0xff]
    %v72 = vld [vmem:[#allocation5 + $0x58] sm:$0xff]
    %v73 = vld [vmem:[#allocation5 + $0x60] sm:$0xff]
    %v74 = vld [vmem:[#allocation5 + $0x68] sm:$0xff]
    %v75 = vld [vmem:[#allocation5 + $0x70] sm:$0xff]
    %v76 = vld [vmem:[#allocation5 + $0x78] sm:$0xff]
    %v77 = vld [vmem:[#allocation5 + $0x80] sm:$0xff]
    %v78 = vld [vmem:[#allocation5 + $0x88] sm:$0xff]
    %v79 = vld [vmem:[#allocation5 + $0x90] sm:$0xff]
    %v80 = vld [vmem:[#allocation5 + $0x98] sm:$0xff]
    %v81 = vld [vmem:[#allocation5 + $0xa0] sm:$0xff]
    %v82 = vld [vmem:[#allocation5 + $0xa8] sm:$0xff]
    %v83 = vld [vmem:[#allocation5 + $0xb0] sm:$0xff]
    %v84 = vld [vmem:[#allocation5 + $0xb8] sm:$0xff]
    %v85 = vld [vmem:[#allocation5 + $0xc0] sm:$0xff]
    %v86 = vld [vmem:[#allocation5 + $0xc8] sm:$0xff]
    %v87 = vld [vmem:[#allocation5 + $0xd0] sm:$0xff]
    %v88 = vld [vmem:[#allocation5 + $0xd8] sm:$0xff]
    %v89 = vld [vmem:[#allocation5 + $0xe0] sm:$0xff]
    %v90 = vld [vmem:[#allocation5 + $0xe8] sm:$0xff]
    %v91 = vld [vmem:[#allocation5 + $0xf0] sm:$0xff]
    %v92 = vld [vmem:[#allocation5 + $0xf8] sm:$0xff]
    %v93 = vld [vmem:[%s2] sm:$0x3]
    %v95 = vlaneseq
    %v96 = vshrl.u32 %v95, 7
    %v97 = vsub.s32 0, %v96
    %v98 = vrot.slane %v93, %v97
    %v99 = vlaneseq
    %v100 = vshrl.u32 %v99, 7
    %v101 = vsub.s32 1, %v100
    %v102 = vrot.slane %v93, %v101
    %105 = vmatprep.subr.mxu0 %v62
    %106 = vmatpush1.msra.mxu0 %v61
    %107 = vmatprep.subr.mxu0 %v64
    %108 = vmatpush1.msra.mxu0 %v63
    %109 = vmatprep.subr.mxu0 %v66
    %110 = vmatpush1.msra.mxu0 %v65
    %111 = vmatprep.subr.mxu0 %v68
    %112 = vmatpush1.msra.mxu0 %v67
    %113 = vmatprep.subr.mxu0 %v70
    %114 = vmatpush1.msra.mxu0 %v69
    %115 = vmatprep.subr.mxu0 %v72
    %116 = vmatpush1.msra.mxu0 %v71
    %117 = vmatprep.subr.mxu0 %v74
    %118 = vmatpush1.msra.mxu0 %v73
    %119 = vmatprep.subr.mxu0 %v76
    %120 = vmatpush1.msra.mxu0 %v75
    %121 = vmatprep.subr.mxu0 %v78
    %122 = vmatpush1.msra.mxu0 %v77
    %123 = vmatprep.subr.mxu0 %v80
    %124 = vmatpush1.msra.mxu0 %v79
    %125 = vmatprep.subr.mxu0 %v82
    %126 = vmatpush1.msra.mxu0 %v81
    %127 = vmatprep.subr.mxu0 %v84
    %128 = vmatpush1.msra.mxu0 %v83
    %129 = vmatprep.subr.mxu0 %v86
    %130 = vmatpush1.msra.mxu0 %v85
    %131 = vmatprep.subr.mxu0 %v88
    %132 = vmatpush1.msra.mxu0 %v87
    %133 = vmatprep.subr.mxu0 %v90
    %134 = vmatpush1.msra.mxu0 %v89
    %135 = vmatprep.subr.mxu0 %v92
    %136 = vmatpush1.msra.mxu0 %v91
    %137 = vmatprep.subr.mxu0 0.0
    %138 = vmatpush1.msra.mxu0 0.0
    %139 = vmatprep.subr.mxu0 0.0
    %140 = vmatpush1.msra.mxu0 0.0
    %141 = vmatprep.subr.mxu0 0.0
    %142 = vmatpush1.msra.mxu0 0.0
    %143 = vmatprep.subr.mxu0 0.0
    %144 = vmatpush1.msra.mxu0 0.0
    %145 = vmatprep.subr.mxu0 0.0
    %146 = vmatpush1.msra.mxu0 0.0
    %147 = vmatprep.subr.mxu0 0.0
    %148 = vmatpush1.msra.mxu0 0.0
    %149 = vmatprep.subr.mxu0 0.0
    %150 = vmatpush1.msra.mxu0 0.0
    %151 = vmatprep.subr.mxu0 0.0
    %152 = vmatpush1.msra.mxu0 0.0
    %153 = vmatprep.subr.mxu0 0.0
    %154 = vmatpush1.msra.mxu0 0.0
    %155 = vmatprep.subr.mxu0 0.0
    %156 = vmatpush1.msra.mxu0 0.0
    %157 = vmatprep.subr.mxu0 0.0
    %158 = vmatpush1.msra.mxu0 0.0
    %159 = vmatprep.subr.mxu0 0.0
    %160 = vmatpush1.msra.mxu0 0.0
    %161 = vmatprep.subr.mxu0 0.0
    %162 = vmatpush1.msra.mxu0 0.0
    %163 = vmatprep.subr.mxu0 0.0
    %164 = vmatpush1.msra.mxu0 0.0
    %165 = vmatprep.subr.mxu0 0.0
    %166 = vmatpush1.msra.mxu0 0.0
    %167 = vmatprep.subr.mxu0 0.0
    %168 = vmatpush1.msra.mxu0 0.0
    %169 = vmatprep.mubr.f32.mxu0 0.0
    %170 = vmatmul.mubr.f32.gmra.mrb[0].mxu0 %v60
    %v171 = vpop.f32.mrb[0].mxu0
    %v172 = vadd.f32 %v98, %v171
    %v173 = vpop.f32.mrb[0].mxu0
    %v174 = vadd.f32 %v102, %v173
    %175 = vdwg.mxu0
    %v176 = vmax.f32 %v172, 0.0
    %v177 = vmax.f32 %v174, 0.0
    %v178 = vld [vmem:[#allocation7] sm:$0xff]
    %v179 = vld [vmem:[#allocation7 + $0x8] sm:$0xff]
    %v180 = vld [vmem:[#allocation7 + $0x10] sm:$0xff]
    %v181 = vld [vmem:[#allocation7 + $0x18] sm:$0xff]
    %v182 = vld [vmem:[#allocation7 + $0x20] sm:$0xff]
    %v183 = vld [vmem:[#allocation7 + $0x28] sm:$0xff]
    %v184 = vld [vmem:[#allocation7 + $0x30] sm:$0xff]
    %v185 = vld [vmem:[#allocation7 + $0x38] sm:$0xff]
    %v186 = vld [vmem:[#allocation7 + $0x40] sm:$0xff]
    %v187 = vld [vmem:[#allocation7 + $0x48] sm:$0xff]
    %v188 = vld [vmem:[#allocation7 + $0x50] sm:$0xff]
    %v189 = vld [vmem:[#allocation7 + $0x58] sm:$0xff]
    %v190 = vld [vmem:[#allocation7 + $0x60] sm:$0xff]
    %v191 = vld [vmem:[#allocation7 + $0x68] sm:$0xff]
    %v192 = vld [vmem:[#allocation7 + $0x70] sm:$0xff]
    %v193 = vld [vmem:[#allocation7 + $0x78] sm:$0xff]
    %v194 = vld [vmem:[#allocation7 + $0x80] sm:$0xff]
    %v195 = vld [vmem:[#allocation7 + $0x88] sm:$0xff]
    %v196 = vld [vmem:[#allocation7 + $0x90] sm:$0xff]
    %v197 = vld [vmem:[#allocation7 + $0x98] sm:$0xff]
    %v198 = vld [vmem:[#allocation7 + $0xa0] sm:$0xff]
    %v199 = vld [vmem:[#allocation7 + $0xa8] sm:$0xff]
    %v200 = vld [vmem:[#allocation7 + $0xb0] sm:$0xff]
    %v201 = vld [vmem:[#allocation7 + $0xb8] sm:$0xff]
    %v202 = vld [vmem:[#allocation7 + $0xc0] sm:$0xff]
    %v203 = vld [vmem:[#allocation7 + $0xc8] sm:$0xff]
    %v204 = vld [vmem:[#allocation7 + $0xd0] sm:$0xff]
    %v205 = vld [vmem:[#allocation7 + $0xd8] sm:$0xff]
    %v206 = vld [vmem:[#allocation7 + $0xe0] sm:$0xff]
    %v207 = vld [vmem:[#allocation7 + $0xe8] sm:$0xff]
    %v208 = vld [vmem:[#allocation7 + $0xf0] sm:$0xff]
    %v209 = vld [vmem:[#allocation7 + $0xf8] sm:$0xff]
    %v210 = vld [vmem:[%s4] sm:$0x1]
    %v212 = vlaneseq
    %v213 = vshrl.u32 %v212, 7
    %v214 = vsub.s32 0, %v213
    %v215 = vrot.slane %v210, %v214
    %217 = vmatprep.subr.mxu0 0.0
    %218 = vmatpush1.msra.mxu0 %v178
    %219 = vmatprep.subr.mxu0 0.0
    %220 = vmatpush1.msra.mxu0 %v179
    %221 = vmatprep.subr.mxu0 0.0
    %222 = vmatpush1.msra.mxu0 %v180
    %223 = vmatprep.subr.mxu0 0.0
    %224 = vmatpush1.msra.mxu0 %v181
    %225 = vmatprep.subr.mxu0 0.0
    %226 = vmatpush1.msra.mxu0 %v182
    %227 = vmatprep.subr.mxu0 0.0
    %228 = vmatpush1.msra.mxu0 %v183
    %229 = vmatprep.subr.mxu0 0.0
    %230 = vmatpush1.msra.mxu0 %v184
    %231 = vmatprep.subr.mxu0 0.0
    %232 = vmatpush1.msra.mxu0 %v185
    %233 = vmatprep.subr.mxu0 0.0
    %234 = vmatpush1.msra.mxu0 %v186
    %235 = vmatprep.subr.mxu0 0.0
    %236 = vmatpush1.msra.mxu0 %v187
    %237 = vmatprep.subr.mxu0 0.0
    %238 = vmatpush1.msra.mxu0 %v188
    %239 = vmatprep.subr.mxu0 0.0
    %240 = vmatpush1.msra.mxu0 %v189
    %241 = vmatprep.subr.mxu0 0.0
    %242 = vmatpush1.msra.mxu0 %v190
    %243 = vmatprep.subr.mxu0 0.0
    %244 = vmatpush1.msra.mxu0 %v191
    %245 = vmatprep.subr.mxu0 0.0
    %246 = vmatpush1.msra.mxu0 %v192
    %247 = vmatprep.subr.mxu0 0.0
    %248 = vmatpush1.msra.mxu0 %v193
    %249 = vmatprep.subr.mxu0 0.0
    %250 = vmatpush1.msra.mxu0 %v194
    %251 = vmatprep.subr.mxu0 0.0
    %252 = vmatpush1.msra.mxu0 %v195
    %253 = vmatprep.subr.mxu0 0.0
    %254 = vmatpush1.msra.mxu0 %v196
    %255 = vmatprep.subr.mxu0 0.0
    %256 = vmatpush1.msra.mxu0 %v197
    %257 = vmatprep.subr.mxu0 0.0
    %258 = vmatpush1.msra.mxu0 %v198
    %259 = vmatprep.subr.mxu0 0.0
    %260 = vmatpush1.msra.mxu0 %v199
    %261 = vmatprep.subr.mxu0 0.0
    %262 = vmatpush1.msra.mxu0 %v200
    %263 = vmatprep.subr.mxu0 0.0
    %264 = vmatpush1.msra.mxu0 %v201
    %265 = vmatprep.subr.mxu0 0.0
    %266 = vmatpush1.msra.mxu0 %v202
    %267 = vmatprep.subr.mxu0 0.0
    %268 = vmatpush1.msra.mxu0 %v203
    %269 = vmatprep.subr.mxu0 0.0
    %270 = vmatpush1.msra.mxu0 %v204
    %271 = vmatprep.subr.mxu0 0.0
    %272 = vmatpush1.msra.mxu0 %v205
    %273 = vmatprep.subr.mxu0 0.0
    %274 = vmatpush1.msra.mxu0 %v206
    %275 = vmatprep.subr.mxu0 0.0
    %276 = vmatpush1.msra.mxu0 %v207
    %277 = vmatprep.subr.mxu0 0.0
    %278 = vmatpush1.msra.mxu0 %v208
    %279 = vmatprep.subr.mxu0 0.0
    %280 = vmatpush1.msra.mxu0 %v209
    %281 = vmatprep.mubr.f32.mxu0 %v177
    %282 = vmatmul.mubr.f32.gmra.mrb[0].mxu0 %v176
    %v283 = vpop.f32.mrb[0].mxu0
    %v284 = vadd.f32 %v215, %v283
    %v285 = vpop.f32.mrb[0].mxu0
    %286 = vdwg.mxu0
    %v287 = vxor.u32 %v284, 2147483648
    %v288 = vmul.f32 %v287, 1.442695
    %v289 = vpow.pop %v288
    %v290 = vadd.f32 %v289, 1.0
    %v291 = vrcp.pop %v290
    %v292 = vmul.f32 1.0, %v291
    %293 = vst [vmem:[#allocation8] sm:$0xff] %v292
    // Predicated region
    $region34: #{tpu_custom_call.1} parent=1 // pred_check
      _
    $region35: #{tpu_custom_call.1} parent=1 // pred_check_branch
      %295 = sbr.rel (0) target = $region37
    $region36: #{tpu_custom_call.1} parent=1 // pred_region
      %s297 = ssub.s32 128, 128
      %298 = vsyncadd [#allocation4], %s297
      %s300 = sshll.u32 [#allocation8], 4
      %s301 = int_to_ptr.vmem [resolvable:$true] %s300
      %303 = dma.vmem_to_hbm [thread:$0]  %s301, 128, %s5, [#allocation4]
    $region37: #{tpu_custom_call.1} parent=1 // pred_fallthru
      _
    // Predicated region
    $region38: #{tpu_custom_call.1} parent=1 // pred_check
      _
    $region39: #{tpu_custom_call.1} parent=1 // pred_check_branch
      %305 = sbr.rel (0) target = $region41
    $region40: #{tpu_custom_call.1} parent=1 // pred_region
      %306 = dma.done [#allocation4], 128
    $region41: #{tpu_custom_call.1} parent=1 // pred_fallthru
      _
    %307 = vsyncpa [#allocation3], 1
    %308 = vsyncpa [#allocation6], 1
    %309 = vsyncpa [#allocation4], 1

</llo_original>
